<compile_context>
chip_gen: v6e
topology: v6e:2x2x1
jax: 0.10.0
libtpu: 0.0.40
codegen_flags: <defaults>
</compile_context>

<pallas_src>
import functools
import inspect

import jax
import jax.numpy as jnp
from jax.experimental import pallas as pl
from jax.experimental.pallas import tpu as pltpu


# ----------------------------- fused FF kernel ------------------------------

def _ff_kernel(x_ref, w1_ref, b1_ref, w2_ref, b2_ref, o_ref, *, approximate_gelu):
    """o = gelu(x @ w1 + b1) @ w2 + b2, fully fused in VMEM.

    x:(TM,D) w1:(D,H) b1:(1,H) w2:(H,D) b2:(1,D) o:(TM,D)
    Matmuls run in the stored dtype on the MXU with f32 accumulation; the
    elementwise epilogue is kept in f32.
    """
    h = jnp.dot(x_ref[...], w1_ref[...], preferred_element_type=jnp.float32)
    h = h + b1_ref[...].astype(jnp.float32)
    if approximate_gelu:
        # tanh GELU runs on the EUP (own VLIW slot) -- useful when VALU-bound (v7x).
        h = jax.nn.gelu(h, approximate=True)
    else:
        # exact (erf) GELU -- matches nn.GELU() default.
        h = 0.5 * h * (1.0 + jax.lax.erf(h * (2.0 ** -0.5)))
    y = jnp.dot(h.astype(w2_ref.dtype), w2_ref[...], preferred_element_type=jnp.float32)
    y = y + b2_ref[...].astype(jnp.float32)
    o_ref[...] = y.astype(o_ref.dtype)
    # TODO(synk): nn.Dropout is identity in eval mode; a training-mode forward would
    # need an in-kernel pltpu.prng_seed/prng_random_bits mask (p is ignored here).


# ------------------------------ spec helpers ---------------------------------

def _supports_pipeline_mode():
    if not hasattr(pl, "Buffered"):
        return False
    try:
        return "pipeline_mode" in inspect.signature(pl.BlockSpec).parameters
    except (TypeError, ValueError):
        return False


def _resident_spec(shape, single_buffer):
    """BlockSpec for an operand whose block never changes across the grid."""
    index_map = lambda i: (0,) * len(shape)
    if single_buffer:
        # Constant index_map => second pipeline buffer is pure VMEM waste.
        return pl.BlockSpec(shape, index_map, pipeline_mode=pl.Buffered(1))
    return pl.BlockSpec(shape, index_map)


def _pick_vmem_limit(block_m, D, H, act_bytes, w_bytes):
    """Scoped-VMEM limit sized from the actual block footprint (with headroom)."""
    need = (
        2 * 2 * block_m * D * act_bytes            # x + out tiles, double-buffered
        + 2 * (D * H + H * D + H + D) * w_bytes    # weights/biases (conservative x2)
        + block_m * (H + D) * 4                    # f32 hidden + f32 pre-cast output
        + (4 << 20)                                # compiler scratch headroom
    )
    try:
        cap = pltpu.get_tpu_info().vmem_capacity_bytes
    except Exception:
        cap = 64 << 20  # conservative: v7x per-TC physical VMEM
    return int(min(max(need, 32 << 20), cap * 3 // 4))


# ------------------------------ public wrapper --------------------------------

def feedforward_pallas(x, w1, b1, w2, b2, *, tm=4096, approximate_gelu=False,
                       single_buffer_weights=None):
    """FeedForward forward pass.  x: (..., dim) -> (..., dim), output dtype == x.dtype."""
    orig_shape = x.shape
    D = orig_shape[-1]
    H = w1.shape[1]
    x2d = x.reshape(-1, D)
    M = x2d.shape[0]

    if single_buffer_weights is None:
        single_buffer_weights = _supports_pipeline_mode()

    # Row tile: always grid = cdiv(M, block_m).  Large M -> tm-sized tiles (masked
    # edge block is safe, the op is row-wise).  Moderate M -> ~M/2 (8-aligned) so the
    # 'parallel' axis has >= 2 steps for megacore.  Small M -> one full-extent block
    # (full-dim blocks are exempt from the (8,128) divisibility rule; no padding).
    if M > tm:
        block_m = tm
    elif M >= 2048:
        block_m = ((M + 15) // 16) * 8
    else:
        block_m = M
    grid = (pl.cdiv(M, block_m),)

    act_bytes = x2d.dtype.itemsize
    w_bytes = w1.dtype.itemsize
    vmem_limit = _pick_vmem_limit(block_m, D, H, act_bytes, w_bytes)

    cost = pl.CostEstimate(
        flops=4 * M * D * H,                       # two matmuls: 2*M*D*H each
        transcendentals=M * H,                     # GELU
        bytes_accessed=M * D * act_bytes * 2 + (D * H + H * D + H + D) * w_bytes,
    )

    out = pl.pallas_call(
        functools.partial(_ff_kernel, approximate_gelu=approximate_gelu),
        out_shape=jax.ShapeDtypeStruct((M, D), x.dtype),
        grid=grid,
        in_specs=[
            pl.BlockSpec((block_m, D), lambda i: (i, 0)),          # x rows (pipelined)
            _resident_spec((D, H), single_buffer_weights),          # w1
            _resident_spec((1, H), single_buffer_weights),          # b1
            _resident_spec((H, D), single_buffer_weights),          # w2
            _resident_spec((1, D), single_buffer_weights),          # b2
        ],
        out_specs=pl.BlockSpec((block_m, D), lambda i: (i, 0)),
        compiler_params=pltpu.CompilerParams(
            dimension_semantics=("parallel",),
            vmem_limit_bytes=vmem_limit),
        cost_estimate=cost,
    )(x2d, w1, b1.reshape(1, H), w2, b2.reshape(1, D))
    return out.reshape(orig_shape)


# ------------------------------ reference ----------------------------------

def _feedforward_ref(x, w1, b1, w2, b2):
    xf = x.astype(jnp.float32)
    h = jnp.dot(xf, w1.astype(jnp.float32)) + b1.astype(jnp.float32)
    h = 0.5 * h * (1.0 + jax.lax.erf(h * (2.0 ** -0.5)))
    return jnp.dot(h, w2.astype(jnp.float32)) + b2.astype(jnp.float32)


# --------------------------------- main -------------------------------------

if __name__ == "__main__":
    key = jax.random.PRNGKey(0)
    k1, k2, k3, k4, kx = jax.random.split(key, 5)

    # Shapes consistent with the surrounding model: dim=64, hidden_dim=32,
    # sequence of 9 tokens (8 frames + cls), batch=2.
    dim, hidden_dim = 64, 32
    b, n = 2, 9

    w1 = 0.05 * jax.random.normal(k1, (dim, hidden_dim), jnp.float32)
    b1 = 0.05 * jax.random.normal(k2, (hidden_dim,), jnp.float32)
    w2 = 0.05 * jax.random.normal(k3, (hidden_dim, dim), jnp.float32)
    b2 = 0.05 * jax.random.normal(k4, (dim,), jnp.float32)
    x = jax.random.normal(kx, (b, n, dim), jnp.float32)

    fwd = jax.jit(feedforward_pallas)
    try:
        out = jax.block_until_ready(fwd(x, w1, b1, w2, b2))
    except Exception:
        # Some Pallas builds reject pl.Buffered(1) on the main-grid pipeline;
        # fall back to default (double-buffered) resident weights.
        fwd = jax.jit(functools.partial(feedforward_pallas, single_buffer_weights=False))
        out = jax.block_until_ready(fwd(x, w1, b1, w2, b2))

    ref = _feedforward_ref(x, w1, b1, w2, b2)
    assert out.shape == (b, n, dim), out.shape
    assert out.dtype == x.dtype, out.dtype
    assert bool(jnp.all(jnp.isfinite(out)))
    assert bool(jnp.allclose(out, ref, atol=1e-5, rtol=1e-5))

    # bf16 I/O path (what a bf16 model feeds): output stays bf16, halved HBM traffic.
    xb, w1b, b1b, w2b, b2b = (a.astype(jnp.bfloat16) for a in (x, w1, b1, w2, b2))
    out_bf16 = jax.block_until_ready(fwd(xb, w1b, b1b, w2b, b2b))
    assert out_bf16.shape == (b, n, dim)
    assert out_bf16.dtype == jnp.bfloat16
    assert bool(jnp.allclose(out_bf16.astype(jnp.float32), ref, atol=5e-2, rtol=5e-2))

    print("KERNEL_OK")
</pallas_src>

<mosaic_0001>
module attributes {stable_mosaic.version = 11 : i64} {
  func.func @_ff_kernel(%arg0: i32, %arg1: memref<18x64xf32, #tpu.memory_space<vmem>>, %arg2: memref<64x32xf32, #tpu.memory_space<vmem>>, %arg3: memref<1x32xf32, #tpu.memory_space<vmem>>, %arg4: memref<32x64xf32, #tpu.memory_space<vmem>>, %arg5: memref<1x64xf32, #tpu.memory_space<vmem>>, %arg6: memref<18x64xf32, #tpu.memory_space<vmem>>) attributes {dimension_semantics = [#tpu.dimension_semantics<parallel>], iteration_bounds = array<i64: 1>, scalar_prefetch = 0 : i64, scratch_operands = 0 : i64, tpu.core_type = #tpu.core_type<tc>, window_params = [{transform_indices = @transform_0, window_bounds = array<i64: 18, 64>}, {pipeline_mode = #tpu.pipeline_mode<synchronous>, transform_indices = @transform_1, window_bounds = array<i64: 64, 32>}, {pipeline_mode = #tpu.pipeline_mode<synchronous>, transform_indices = @transform_2, window_bounds = array<i64: 1, 32>}, {pipeline_mode = #tpu.pipeline_mode<synchronous>, transform_indices = @transform_3, window_bounds = array<i64: 32, 64>}, {pipeline_mode = #tpu.pipeline_mode<synchronous>, transform_indices = @transform_4, window_bounds = array<i64: 1, 64>}, {transform_indices = @transform_5, window_bounds = array<i64: 18, 64>}]} {
    %c0 = arith.constant 0 : index
    %c0_0 = arith.constant 0 : index
    %0 = vector.load %arg1[%c0, %c0_0] : memref<18x64xf32, #tpu.memory_space<vmem>>, vector<18x64xf32>
    %c0_1 = arith.constant 0 : index
    %c0_2 = arith.constant 0 : index
    %1 = vector.load %arg2[%c0_1, %c0_2] : memref<64x32xf32, #tpu.memory_space<vmem>>, vector<64x32xf32>
    %cst = arith.constant dense<0.000000e+00> : vector<18x32xf32>
    %2 = tpu.matmul %0, %1, %cst {dimension_numbers = #tpu.dot_dimension_numbers<[1], [0], [0], [1], [0, 0, 1, 1], [], []>} : vector<18x64xf32>, vector<64x32xf32>, vector<18x32xf32> -> vector<18x32xf32>
    %c0_3 = arith.constant 0 : index
    %c0_4 = arith.constant 0 : index
    %3 = vector.load %arg3[%c0_3, %c0_4] : memref<1x32xf32, #tpu.memory_space<vmem>>, vector<1x32xf32>
    %4 = vector.broadcast %3 : vector<1x32xf32> to vector<18x32xf32>
    %5 = arith.addf %2, %4 : vector<18x32xf32>
    %cst_5 = arith.constant 5.000000e-01 : f32
    %6 = vector.broadcast %cst_5 : f32 to vector<18x32xf32>
    %7 = arith.mulf %6, %5 : vector<18x32xf32>
    %cst_6 = arith.constant 0.707106769 : f32
    %8 = vector.broadcast %cst_6 : f32 to vector<18x32xf32>
    %9 = arith.mulf %5, %8 : vector<18x32xf32>
    %10 = math.erf %9 : vector<18x32xf32>
    %cst_7 = arith.constant 1.000000e+00 : f32
    %11 = vector.broadcast %cst_7 : f32 to vector<18x32xf32>
    %12 = arith.addf %11, %10 : vector<18x32xf32>
    %13 = arith.mulf %7, %12 : vector<18x32xf32>
    %c0_8 = arith.constant 0 : index
    %c0_9 = arith.constant 0 : index
    %14 = vector.load %arg4[%c0_8, %c0_9] : memref<32x64xf32, #tpu.memory_space<vmem>>, vector<32x64xf32>
    %cst_10 = arith.constant dense<0.000000e+00> : vector<18x64xf32>
    %15 = tpu.matmul %13, %14, %cst_10 {dimension_numbers = #tpu.dot_dimension_numbers<[1], [0], [0], [1], [0, 0, 1, 1], [], []>} : vector<18x32xf32>, vector<32x64xf32>, vector<18x64xf32> -> vector<18x64xf32>
    %c0_11 = arith.constant 0 : index
    %c0_12 = arith.constant 0 : index
    %16 = vector.load %arg5[%c0_11, %c0_12] : memref<1x64xf32, #tpu.memory_space<vmem>>, vector<1x64xf32>
    %17 = vector.broadcast %16 : vector<1x64xf32> to vector<18x64xf32>
    %18 = arith.addf %15, %17 : vector<18x64xf32>
    %c0_13 = arith.constant 0 : index
    %c0_14 = arith.constant 0 : index
    %19 = vector.load %arg6[%c0_13, %c0_14] : memref<18x64xf32, #tpu.memory_space<vmem>>, vector<18x64xf32>
    tpu.vector_store %arg6[%c0_13, %c0_14], %18 {strides = array<i32>} : memref<18x64xf32, #tpu.memory_space<vmem>>, vector<18x64xf32>,
    return
  }
  func.func @transform_0(%arg0: i32) -> (i32, i32) {
    %c0_i32 = arith.constant 0 : i32
    %c0_i32_0 = arith.constant 0 : i32
    return %arg0, %c0_i32 : i32, i32
  }
  func.func @transform_1(%arg0: i32) -> (i32, i32) {
    %c0_i32 = arith.constant 0 : i32
    %c0_i32_0 = arith.constant 0 : i32
    %c0_i32_1 = arith.constant 0 : i32
    return %c0_i32, %c0_i32_0 : i32, i32
  }
  func.func @transform_2(%arg0: i32) -> (i32, i32) {
    %c0_i32 = arith.constant 0 : i32
    %c0_i32_0 = arith.constant 0 : i32
    %c0_i32_1 = arith.constant 0 : i32
    return %c0_i32, %c0_i32_0 : i32, i32
  }
  func.func @transform_3(%arg0: i32) -> (i32, i32) {
    %c0_i32 = arith.constant 0 : i32
    %c0_i32_0 = arith.constant 0 : i32
    %c0_i32_1 = arith.constant 0 : i32
    return %c0_i32, %c0_i32_0 : i32, i32
  }
  func.func @transform_4(%arg0: i32) -> (i32, i32) {
    %c0_i32 = arith.constant 0 : i32
    %c0_i32_0 = arith.constant 0 : i32
    %c0_i32_1 = arith.constant 0 : i32
    return %c0_i32, %c0_i32_0 : i32, i32
  }
  func.func @transform_5(%arg0: i32) -> (i32, i32) {
    %c0_i32 = arith.constant 0 : i32
    %c0_i32_0 = arith.constant 0 : i32
    return %arg0, %c0_i32 : i32, i32
  }
}

module attributes {stable_mosaic.version = 11 : i64} {
  func.func @_ff_kernel(%arg0: i32, %arg1: memref<18x64xf32, #tpu.memory_space<vmem>>, %arg2: memref<64x32xf32, #tpu.memory_space<vmem>>, %arg3: memref<1x32xf32, #tpu.memory_space<vmem>>, %arg4: memref<32x64xf32, #tpu.memory_space<vmem>>, %arg5: memref<1x64xf32, #tpu.memory_space<vmem>>, %arg6: memref<18x64xf32, #tpu.memory_space<vmem>>) attributes {dimension_semantics = [#tpu.dimension_semantics<parallel>], iteration_bounds = array<i64: 1>, scalar_prefetch = 0 : i64, scratch_operands = 0 : i64, tpu.core_type = #tpu.core_type<tc>, window_params = [{transform_indices = @transform_0, window_bounds = array<i64: 18, 64>}, {pipeline_mode = #tpu.pipeline_mode<synchronous>, transform_indices = @transform_1, window_bounds = array<i64: 64, 32>}, {pipeline_mode = #tpu.pipeline_mode<synchronous>, transform_indices = @transform_2, window_bounds = array<i64: 1, 32>}, {pipeline_mode = #tpu.pipeline_mode<synchronous>, transform_indices = @transform_3, window_bounds = array<i64: 32, 64>}, {pipeline_mode = #tpu.pipeline_mode<synchronous>, transform_indices = @transform_4, window_bounds = array<i64: 1, 64>}, {transform_indices = @transform_5, window_bounds = array<i64: 18, 64>}]} {
    %c0 = arith.constant 0 : index
    %c0_0 = arith.constant 0 : index
    %0 = vector.load %arg1[%c0, %c0_0] : memref<18x64xf32, #tpu.memory_space<vmem>>, vector<18x64xf32>
    %c0_1 = arith.constant 0 : index
    %c0_2 = arith.constant 0 : index
    %1 = vector.load %arg2[%c0_1, %c0_2] : memref<64x32xf32, #tpu.memory_space<vmem>>, vector<64x32xf32>
    %cst = arith.constant dense<0.000000e+00> : vector<18x32xf32>
    %2 = tpu.matmul %0, %1, %cst {dimension_numbers = #tpu.dot_dimension_numbers<[1], [0], [0], [1], [0, 0, 1, 1], [], []>} : vector<18x64xf32>, vector<64x32xf32>, vector<18x32xf32> -> vector<18x32xf32>
    %c0_3 = arith.constant 0 : index
    %c0_4 = arith.constant 0 : index
    %3 = vector.load %arg3[%c0_3, %c0_4] : memref<1x32xf32, #tpu.memory_space<vmem>>, vector<1x32xf32>
    %4 = vector.broadcast %3 : vector<1x32xf32> to vector<18x32xf32>
    %5 = arith.addf %2, %4 : vector<18x32xf32>
    %cst_5 = arith.constant 5.000000e-01 : f32
    %6 = vector.broadcast %cst_5 : f32 to vector<18x32xf32>
    %7 = arith.mulf %6, %5 : vector<18x32xf32>
    %cst_6 = arith.constant 0.707106769 : f32
    %8 = vector.broadcast %cst_6 : f32 to vector<18x32xf32>
    %9 = arith.mulf %5, %8 : vector<18x32xf32>
    %10 = math.erf %9 : vector<18x32xf32>
    %cst_7 = arith.constant 1.000000e+00 : f32
    %11 = vector.broadcast %cst_7 : f32 to vector<18x32xf32>
    %12 = arith.addf %11, %10 : vector<18x32xf32>
    %13 = arith.mulf %7, %12 : vector<18x32xf32>
    %c0_8 = arith.constant 0 : index
    %c0_9 = arith.constant 0 : index
    %14 = vector.load %arg4[%c0_8, %c0_9] : memref<32x64xf32, #tpu.memory_space<vmem>>, vector<32x64xf32>
    %cst_10 = arith.constant dense<0.000000e+00> : vector<18x64xf32>
    %15 = tpu.matmul %13, %14, %cst_10 {dimension_numbers = #tpu.dot_dimension_numbers<[1], [0], [0], [1], [0, 0, 1, 1], [], []>} : vector<18x32xf32>, vector<32x64xf32>, vector<18x64xf32> -> vector<18x64xf32>
    %c0_11 = arith.constant 0 : index
    %c0_12 = arith.constant 0 : index
    %16 = vector.load %arg5[%c0_11, %c0_12] : memref<1x64xf32, #tpu.memory_space<vmem>>, vector<1x64xf32>
    %17 = vector.broadcast %16 : vector<1x64xf32> to vector<18x64xf32>
    %18 = arith.addf %15, %17 : vector<18x64xf32>
    %c0_13 = arith.constant 0 : index
    %c0_14 = arith.constant 0 : index
    %19 = vector.load %arg6[%c0_13, %c0_14] : memref<18x64xf32, #tpu.memory_space<vmem>>, vector<18x64xf32>
    tpu.vector_store %arg6[%c0_13, %c0_14], %18 {strides = array<i32>} : memref<18x64xf32, #tpu.memory_space<vmem>>, vector<18x64xf32>,
    return
  }
  func.func @transform_0(%arg0: i32) -> (i32, i32) {
    %c0_i32 = arith.constant 0 : i32
    %c0_i32_0 = arith.constant 0 : i32
    return %arg0, %c0_i32 : i32, i32
  }
  func.func @transform_1(%arg0: i32) -> (i32, i32) {
    %c0_i32 = arith.constant 0 : i32
    %c0_i32_0 = arith.constant 0 : i32
    %c0_i32_1 = arith.constant 0 : i32
    return %c0_i32, %c0_i32_0 : i32, i32
  }
  func.func @transform_2(%arg0: i32) -> (i32, i32) {
    %c0_i32 = arith.constant 0 : i32
    %c0_i32_0 = arith.constant 0 : i32
    %c0_i32_1 = arith.constant 0 : i32
    return %c0_i32, %c0_i32_0 : i32, i32
  }
  func.func @transform_3(%arg0: i32) -> (i32, i32) {
    %c0_i32 = arith.constant 0 : i32
    %c0_i32_0 = arith.constant 0 : i32
    %c0_i32_1 = arith.constant 0 : i32
    return %c0_i32, %c0_i32_0 : i32, i32
  }
  func.func @transform_4(%arg0: i32) -> (i32, i32) {
    %c0_i32 = arith.constant 0 : i32
    %c0_i32_0 = arith.constant 0 : i32
    %c0_i32_1 = arith.constant 0 : i32
    return %c0_i32, %c0_i32_0 : i32, i32
  }
  func.func @transform_5(%arg0: i32) -> (i32, i32) {
    %c0_i32 = arith.constant 0 : i32
    %c0_i32_0 = arith.constant 0 : i32
    return %arg0, %c0_i32 : i32, i32
  }
}

</mosaic_0001>

<llo_original>
// kernel: feedforward_pallas.1
$region0: #{feedforward_pallas.1}
  #allocation0 [shape = 'u32[]', space=smem, size = 0x4, offset = 0x4, fixed_abs, tag = 'smem constant byte address 0x4 - core index']
  #allocation1 [shape = 'u32[144,128]{1,0:T(1,128)}', space=vmem, size = 0x12000, scoped, tag = 'internal scratch']
  %s0 = inlined_call_operand.vmem [shape: f32[18,64], index: 0, kind: input, shape index: {}]
  %s1 = inlined_call_operand.vmem [shape: f32[64,32], index: 1, kind: input, shape index: {}]
  %s2 = inlined_call_operand.vmem [shape: f32[1,32], index: 2, kind: input, shape index: {}]
  %s3 = inlined_call_operand.vmem [shape: f32[32,64], index: 3, kind: input, shape index: {}]
  %s4 = inlined_call_operand.vmem [shape: f32[1,64], index: 4, kind: input, shape index: {}]
  %s5 = inlined_call_operand.vmem [shape: f32[18,64], index: 5, kind: output, shape index: {}]
  %s6 = sld [smem:[#allocation0]]
  $region30: #{feedforward_pallas.1} parent=0
    _
  %s8 = ssub.s32 1, %s6
  %s9 = scalar_select 0, %s8, %s6
  // Predicated region
  $region2: #{feedforward_pallas.1} parent=0 // pred_check
    _
  $region3: #{feedforward_pallas.1} parent=0 // pred_check_branch
    %11 = sbr.rel (0) target = $region5
  $region4: #{feedforward_pallas.1} parent=0 // pred_region
    _
  $region5: #{feedforward_pallas.1} parent=0 // pred_fallthru
    _
  // Predicated region
  $region6: #{feedforward_pallas.1} parent=0 // pred_check
    _
  $region7: #{feedforward_pallas.1} parent=0 // pred_check_branch
    %13 = sbr.rel (0) target = $region9
  $region8: #{feedforward_pallas.1} parent=0 // pred_region
    _
  $region9: #{feedforward_pallas.1} parent=0 // pred_fallthru
    _
  // Predicated region
  $region10: #{feedforward_pallas.1} parent=0 // pred_check
    _
  $region11: #{feedforward_pallas.1} parent=0 // pred_check_branch
    %15 = sbr.rel (0) target = $region13
  $region12: #{feedforward_pallas.1} parent=0 // pred_region
    _
  $region13: #{feedforward_pallas.1} parent=0 // pred_fallthru
    _
  // Predicated region
  $region14: #{feedforward_pallas.1} parent=0 // pred_check
    _
  $region15: #{feedforward_pallas.1} parent=0 // pred_check_branch
    %17 = sbr.rel (0) target = $region17
  $region16: #{feedforward_pallas.1} parent=0 // pred_region
    _
  $region17: #{feedforward_pallas.1} parent=0 // pred_fallthru
    _
  // Predicated region
  $region18: #{feedforward_pallas.1} parent=0 // pred_check
    _
  $region19: #{feedforward_pallas.1} parent=0 // pred_check_branch
    %19 = sbr.rel (0) target = $region21
  $region20: #{feedforward_pallas.1} parent=0 // pred_region
    _
  $region21: #{feedforward_pallas.1} parent=0 // pred_fallthru
    _
  %v20 = vld [vmem:[%s0] sm:$0xff]
  %v21 = vld [vmem:[%s0 + $0x8] sm:$0xff]
  %v22 = vld [vmem:[%s0 + $0x10] sm:$0x3]
  %v23 = vld [vmem:[%s1] sm:$0xff]
  %v24 = vld [vmem:[%s1 + $0x8] sm:$0xff]
  %v25 = vld [vmem:[%s1 + $0x10] sm:$0xff]
  %v26 = vld [vmem:[%s1 + $0x18] sm:$0xff]
  %v27 = vld [vmem:[%s1 + $0x20] sm:$0xff]
  %v28 = vld [vmem:[%s1 + $0x28] sm:$0xff]
  %v29 = vld [vmem:[%s1 + $0x30] sm:$0xff]
  %v30 = vld [vmem:[%s1 + $0x38] sm:$0xff]
  %v31 = vld [vmem:[%s2] sm:$0x1]
  %v33 = vlaneseq
  %v34 = vshrl.u32 %v33, 7
  %v35 = vsub.s32 0, %v34
  %v36 = vrot.slane %v31, %v35
  %vm38 = vcmask 523264
  %v40 = vsel %vm38, %v20, 0
  %v43 = vsel %vm38, %v21, 0
  %v46 = vsel %vm38, %v22, 0
  %48 = vmatprep.subr.mxu0 0.0
  %49 = vmatpush1.msra.mxu0 0.0
  %50 = vmatprep.subr.mxu0 0.0
  %51 = vmatpush1.msra.mxu0 0.0
  %52 = vmatprep.subr.mxu0 0.0
  %53 = vmatpush1.msra.mxu0 0.0
  %54 = vmatprep.subr.mxu0 0.0
  %55 = vmatpush1.msra.mxu0 0.0
  %56 = vmatprep.subr.mxu0 0.0
  %57 = vmatpush1.msra.mxu0 0.0
  %58 = vmatprep.subr.mxu0 0.0
  %59 = vmatpush1.msra.mxu0 0.0
  %60 = vmatprep.subr.mxu0 0.0
  %61 = vmatpush1.msra.mxu0 0.0
  %62 = vmatprep.subr.mxu0 0.0
  %63 = vmatpush1.msra.mxu0 0.0
  %64 = vmatprep.subr.mxu0 0.0
  %65 = vmatpush1.msra.mxu0 %v30
  %66 = vmatprep.subr.mxu0 0.0
  %67 = vmatpush1.msra.mxu0 %v29
  %68 = vmatprep.subr.mxu0 0.0
  %69 = vmatpush1.msra.mxu0 %v28
  %70 = vmatprep.subr.mxu0 0.0
  %71 = vmatpush1.msra.mxu0 %v27
  %72 = vmatprep.subr.mxu0 0.0
  %73 = vmatpush1.msra.mxu0 %v26
  %74 = vmatprep.subr.mxu0 0.0
  %75 = vmatpush1.msra.mxu0 %v25
  %76 = vmatprep.subr.mxu0 0.0
  %77 = vmatpush1.msra.mxu0 %v24
  %78 = vmatprep.subr.mxu0 0.0
  %79 = vmatpush1.msra.mxu0 %v23
  %80 = vmatprep.subr.mxu0 0.0
  %81 = vmatpush2.msra.mxu0 0.0
  %82 = vmatprep.subr.mxu0 0.0
  %83 = vmatpush2.msra.mxu0 0.0
  %84 = vmatprep.subr.mxu0 0.0
  %85 = vmatpush2.msra.mxu0 0.0
  %86 = vmatprep.subr.mxu0 0.0
  %87 = vmatpush2.msra.mxu0 0.0
  %88 = vmatprep.subr.mxu0 0.0
  %89 = vmatpush2.msra.mxu0 0.0
  %90 = vmatprep.subr.mxu0 0.0
  %91 = vmatpush2.msra.mxu0 0.0
  %92 = vmatprep.subr.mxu0 0.0
  %93 = vmatpush2.msra.mxu0 0.0
  %94 = vmatprep.subr.mxu0 0.0
  %95 = vmatpush2.msra.mxu0 0.0
  %96 = vmatprep.subr.mxu0 0.0
  %97 = vmatpush2.msra.mxu0 0.0
  %98 = vmatprep.subr.mxu0 0.0
  %99 = vmatpush2.msra.mxu0 0.0
  %100 = vmatprep.subr.mxu0 0.0
  %101 = vmatpush2.msra.mxu0 0.0
  %102 = vmatprep.subr.mxu0 0.0
  %103 = vmatpush2.msra.mxu0 0.0
  %104 = vmatprep.subr.mxu0 0.0
  %105 = vmatpush2.msra.mxu0 0.0
  %106 = vmatprep.subr.mxu0 0.0
  %107 = vmatpush2.msra.mxu0 0.0
  %108 = vmatprep.subr.mxu0 0.0
  %109 = vmatpush2.msra.mxu0 0.0
  %110 = vmatprep.subr.mxu0 0.0
  %111 = vmatpush2.msra.mxu0 0.0
  %112 = vmatprep.mubr.f32.mxu0 0.0
  %113 = vmatmul.mubr.f32.gmra.mxu0 %v40
  %v114 = vpop.f32.mrf.mxu0
  %v115 = vadd.f32 %v36, %v114
  %v116 = vpop.f32.mrf.mxu0
  %117 = vmatprep.mubr.f32.mxu0 0.0
  %118 = vmatmul.mubr.f32.gmra.mxu0 %v43
  %v119 = vpop.f32.mrf.mxu0
  %v120 = vadd.f32 %v36, %v119
  %v121 = vpop.f32.mrf.mxu0
  %122 = vmatprep.mubr.f32.mxu0 0.0
  %123 = vmatmul.mubr.f32.gmra.mxu0 %v46
  %v124 = vpop.f32.mrf.mxu0
  %v125 = vadd.f32 %v36, %v124
  %v126 = vpop.f32.mrf.mxu0
  %127 = vdwg.mxu0
  %v128 = vmul.f32 %v115, 0.5
  %v129 = vmul.f32 %v120, 0.5
  %v130 = vmul.f32 %v125, 0.5
  %v131 = vmul.f32 %v115, 0.70710677
  %v132 = vmul.f32 %v120, 0.70710677
  %v133 = vmul.f32 %v125, 0.70710677
  %v134 = verf.f32.pop %v131
  %v135 = verf.f32.pop %v132
  %v136 = verf.f32.pop %v133
  %v137 = vadd.f32 %v134, 1.0
  %v138 = vadd.f32 %v135, 1.0
  %v139 = vadd.f32 %v136, 1.0
  %v140 = vmul.f32 %v128, %v137
  %v141 = vmul.f32 %v129, %v138
  %v142 = vmul.f32 %v130, %v139
  %v143 = vld [vmem:[%s3] sm:$0xff]
  %v144 = vld [vmem:[%s3 + $0x8] sm:$0xff]
  %v145 = vld [vmem:[%s3 + $0x10] sm:$0xff]
  %v146 = vld [vmem:[%s3 + $0x18] sm:$0xff]
  %v147 = vld [vmem:[%s4] sm:$0x1]
  %v149 = vlaneseq
  %v150 = vshrl.u32 %v149, 7
  %v151 = vsub.s32 0, %v150
  %v152 = vrot.slane %v147, %v151
  %vm154 = vcmask 261120
  %v156 = vsel %vm154, %v140, 0
  %v159 = vsel %vm154, %v141, 0
  %v162 = vsel %vm154, %v142, 0
  %164 = vmatprep.subr.mxu0 0.0
  %165 = vmatpush1.msra.mxu0 0.0
  %166 = vmatprep.subr.mxu0 0.0
  %167 = vmatpush1.msra.mxu0 0.0
  %168 = vmatprep.subr.mxu0 0.0
  %169 = vmatpush1.msra.mxu0 0.0
  %170 = vmatprep.subr.mxu0 0.0
  %171 = vmatpush1.msra.mxu0 0.0
  %172 = vmatprep.subr.mxu0 0.0
  %173 = vmatpush1.msra.mxu0 0.0
  %174 = vmatprep.subr.mxu0 0.0
  %175 = vmatpush1.msra.mxu0 0.0
  %176 = vmatprep.subr.mxu0 0.0
  %177 = vmatpush1.msra.mxu0 0.0
  %178 = vmatprep.subr.mxu0 0.0
  %179 = vmatpush1.msra.mxu0 0.0
  %180 = vmatprep.subr.mxu0 0.0
  %181 = vmatpush1.msra.mxu0 0.0
  %182 = vmatprep.subr.mxu0 0.0
  %183 = vmatpush1.msra.mxu0 0.0
  %184 = vmatprep.subr.mxu0 0.0
  %185 = vmatpush1.msra.mxu0 0.0
  %186 = vmatprep.subr.mxu0 0.0
  %187 = vmatpush1.msra.mxu0 0.0
  %188 = vmatprep.subr.mxu0 0.0
  %189 = vmatpush1.msra.mxu0 %v146
  %190 = vmatprep.subr.mxu0 0.0
  %191 = vmatpush1.msra.mxu0 %v145
  %192 = vmatprep.subr.mxu0 0.0
  %193 = vmatpush1.msra.mxu0 %v144
  %194 = vmatprep.subr.mxu0 0.0
  %195 = vmatpush1.msra.mxu0 %v143
  %196 = vmatprep.subr.mxu0 0.0
  %197 = vmatpush2.msra.mxu0 0.0
  %198 = vmatprep.subr.mxu0 0.0
  %199 = vmatpush2.msra.mxu0 0.0
  %200 = vmatprep.subr.mxu0 0.0
  %201 = vmatpush2.msra.mxu0 0.0
  %202 = vmatprep.subr.mxu0 0.0
  %203 = vmatpush2.msra.mxu0 0.0
  %204 = vmatprep.subr.mxu0 0.0
  %205 = vmatpush2.msra.mxu0 0.0
  %206 = vmatprep.subr.mxu0 0.0
  %207 = vmatpush2.msra.mxu0 0.0
  %208 = vmatprep.subr.mxu0 0.0
  %209 = vmatpush2.msra.mxu0 0.0
  %210 = vmatprep.subr.mxu0 0.0
  %211 = vmatpush2.msra.mxu0 0.0
  %212 = vmatprep.subr.mxu0 0.0
  %213 = vmatpush2.msra.mxu0 0.0
  %214 = vmatprep.subr.mxu0 0.0
  %215 = vmatpush2.msra.mxu0 0.0
  %216 = vmatprep.subr.mxu0 0.0
  %217 = vmatpush2.msra.mxu0 0.0
  %218 = vmatprep.subr.mxu0 0.0
  %219 = vmatpush2.msra.mxu0 0.0
  %220 = vmatprep.subr.mxu0 0.0
  %221 = vmatpush2.msra.mxu0 0.0
  %222 = vmatprep.subr.mxu0 0.0
  %223 = vmatpush2.msra.mxu0 0.0
  %224 = vmatprep.subr.mxu0 0.0
  %225 = vmatpush2.msra.mxu0 0.0
  %226 = vmatprep.subr.mxu0 0.0
  %227 = vmatpush2.msra.mxu0 0.0
  %228 = vmatprep.mubr.f32.mxu0 0.0
  %229 = vmatmul.mubr.f32.gmra.mxu0 %v156
  %v230 = vpop.f32.mrf.mxu0
  %v231 = vadd.f32 %v152, %v230
  %v232 = vpop.f32.mrf.mxu0
  %233 = vmatprep.mubr.f32.mxu0 0.0
  %234 = vmatmul.mubr.f32.gmra.mxu0 %v159
  %v235 = vpop.f32.mrf.mxu0
  %v236 = vadd.f32 %v152, %v235
  %v237 = vpop.f32.mrf.mxu0
  %238 = vmatprep.mubr.f32.mxu0 0.0
  %239 = vmatmul.mubr.f32.gmra.mxu0 %v162
  %v240 = vpop.f32.mrf.mxu0
  %v241 = vadd.f32 %v152, %v240
  %v242 = vpop.f32.mrf.mxu0
  %243 = vdwg.mxu0
  %244 = vst.msk [vmem:[%s5] sm:$0xff] %vm38, %v231
  %245 = vst.msk [vmem:[%s5 + $0x8] sm:$0xff] %vm38, %v236
  %vm246 = vcmask 517120
  %247 = vst.msk [vmem:[%s5 + $0x10] sm:$0x3] %vm246, %v241
  // Predicated region
  $region22: #{feedforward_pallas.1} parent=0 // pred_check
    _
  $region23: #{feedforward_pallas.1} parent=0 // pred_check_branch
    %249 = sbr.rel (0) target = $region25
  $region24: #{feedforward_pallas.1} parent=0 // pred_region
    _
  $region25: #{feedforward_pallas.1} parent=0 // pred_fallthru
    _
  // Predicated region
  $region26: #{feedforward_pallas.1} parent=0 // pred_check
    _
  $region27: #{feedforward_pallas.1} parent=0 // pred_check_branch
    %251 = sbr.rel (0) target = $region29
  $region28: #{feedforward_pallas.1} parent=0 // pred_region
    _
  $region29: #{feedforward_pallas.1} parent=0 // pred_fallthru
    _

// kernel: feedforward_pallas.1
$region0: #{feedforward_pallas.1}
  #allocation0 [shape = 'u32[]', space=smem, size = 0x4, offset = 0x4, fixed_abs, tag = 'smem constant byte address 0x4 - core index']
  #allocation1 [shape = 'u32[144,128]{1,0:T(1,128)}', space=vmem, size = 0x12000, scoped, tag = 'internal scratch']
  %s0 = inlined_call_operand.vmem [shape: f32[18,64], index: 0, kind: input, shape index: {}]
  %s1 = inlined_call_operand.vmem [shape: f32[64,32], index: 1, kind: input, shape index: {}]
  %s2 = inlined_call_operand.vmem [shape: f32[1,32], index: 2, kind: input, shape index: {}]
  %s3 = inlined_call_operand.vmem [shape: f32[32,64], index: 3, kind: input, shape index: {}]
  %s4 = inlined_call_operand.vmem [shape: f32[1,64], index: 4, kind: input, shape index: {}]
  %s5 = inlined_call_operand.vmem [shape: f32[18,64], index: 5, kind: output, shape index: {}]
  %s6 = sld [smem:[#allocation0]]
  $region30: #{feedforward_pallas.1} parent=0
    _
  %s8 = ssub.s32 1, %s6
  %s9 = scalar_select 0, %s8, %s6
  // Predicated region
  $region2: #{feedforward_pallas.1} parent=0 // pred_check
    _
  $region3: #{feedforward_pallas.1} parent=0 // pred_check_branch
    %11 = sbr.rel (0) target = $region5
  $region4: #{feedforward_pallas.1} parent=0 // pred_region
    _
  $region5: #{feedforward_pallas.1} parent=0 // pred_fallthru
    _
  // Predicated region
  $region6: #{feedforward_pallas.1} parent=0 // pred_check
    _
  $region7: #{feedforward_pallas.1} parent=0 // pred_check_branch
    %13 = sbr.rel (0) target = $region9
  $region8: #{feedforward_pallas.1} parent=0 // pred_region
    _
  $region9: #{feedforward_pallas.1} parent=0 // pred_fallthru
    _
  // Predicated region
  $region10: #{feedforward_pallas.1} parent=0 // pred_check
    _
  $region11: #{feedforward_pallas.1} parent=0 // pred_check_branch
    %15 = sbr.rel (0) target = $region13
  $region12: #{feedforward_pallas.1} parent=0 // pred_region
    _
  $region13: #{feedforward_pallas.1} parent=0 // pred_fallthru
    _
  // Predicated region
  $region14: #{feedforward_pallas.1} parent=0 // pred_check
    _
  $region15: #{feedforward_pallas.1} parent=0 // pred_check_branch
    %17 = sbr.rel (0) target = $region17
  $region16: #{feedforward_pallas.1} parent=0 // pred_region
    _
  $region17: #{feedforward_pallas.1} parent=0 // pred_fallthru
    _
  // Predicated region
  $region18: #{feedforward_pallas.1} parent=0 // pred_check
    _
  $region19: #{feedforward_pallas.1} parent=0 // pred_check_branch
    %19 = sbr.rel (0) target = $region21
  $region20: #{feedforward_pallas.1} parent=0 // pred_region
    _
  $region21: #{feedforward_pallas.1} parent=0 // pred_fallthru
    _
  %v20 = vld [vmem:[%s0] sm:$0xff]
  %v21 = vld [vmem:[%s0 + $0x8] sm:$0xff]
  %v22 = vld [vmem:[%s0 + $0x10] sm:$0x3]
  %v23 = vld [vmem:[%s1] sm:$0xff]
  %v24 = vld [vmem:[%s1 + $0x8] sm:$0xff]
  %v25 = vld [vmem:[%s1 + $0x10] sm:$0xff]
  %v26 = vld [vmem:[%s1 + $0x18] sm:$0xff]
  %v27 = vld [vmem:[%s1 + $0x20] sm:$0xff]
  %v28 = vld [vmem:[%s1 + $0x28] sm:$0xff]
  %v29 = vld [vmem:[%s1 + $0x30] sm:$0xff]
  %v30 = vld [vmem:[%s1 + $0x38] sm:$0xff]
  %v31 = vld [vmem:[%s2] sm:$0x1]
  %v33 = vlaneseq
  %v34 = vshrl.u32 %v33, 7
  %v35 = vsub.s32 0, %v34
  %v36 = vrot.slane %v31, %v35
  %vm38 = vcmask 523264
  %v40 = vsel %vm38, %v20, 0
  %v43 = vsel %vm38, %v21, 0
  %v46 = vsel %vm38, %v22, 0
  %48 = vmatprep.subr.mxu0 0.0
  %49 = vmatpush1.msra.mxu0 0.0
  %50 = vmatprep.subr.mxu0 0.0
  %51 = vmatpush1.msra.mxu0 0.0
  %52 = vmatprep.subr.mxu0 0.0
  %53 = vmatpush1.msra.mxu0 0.0
  %54 = vmatprep.subr.mxu0 0.0
  %55 = vmatpush1.msra.mxu0 0.0
  %56 = vmatprep.subr.mxu0 0.0
  %57 = vmatpush1.msra.mxu0 0.0
  %58 = vmatprep.subr.mxu0 0.0
  %59 = vmatpush1.msra.mxu0 0.0
  %60 = vmatprep.subr.mxu0 0.0
  %61 = vmatpush1.msra.mxu0 0.0
  %62 = vmatprep.subr.mxu0 0.0
  %63 = vmatpush1.msra.mxu0 0.0
  %64 = vmatprep.subr.mxu0 0.0
  %65 = vmatpush1.msra.mxu0 %v30
  %66 = vmatprep.subr.mxu0 0.0
  %67 = vmatpush1.msra.mxu0 %v29
  %68 = vmatprep.subr.mxu0 0.0
  %69 = vmatpush1.msra.mxu0 %v28
  %70 = vmatprep.subr.mxu0 0.0
  %71 = vmatpush1.msra.mxu0 %v27
  %72 = vmatprep.subr.mxu0 0.0
  %73 = vmatpush1.msra.mxu0 %v26
  %74 = vmatprep.subr.mxu0 0.0
  %75 = vmatpush1.msra.mxu0 %v25
  %76 = vmatprep.subr.mxu0 0.0
  %77 = vmatpush1.msra.mxu0 %v24
  %78 = vmatprep.subr.mxu0 0.0
  %79 = vmatpush1.msra.mxu0 %v23
  %80 = vmatprep.subr.mxu0 0.0
  %81 = vmatpush2.msra.mxu0 0.0
  %82 = vmatprep.subr.mxu0 0.0
  %83 = vmatpush2.msra.mxu0 0.0
  %84 = vmatprep.subr.mxu0 0.0
  %85 = vmatpush2.msra.mxu0 0.0
  %86 = vmatprep.subr.mxu0 0.0
  %87 = vmatpush2.msra.mxu0 0.0
  %88 = vmatprep.subr.mxu0 0.0
  %89 = vmatpush2.msra.mxu0 0.0
  %90 = vmatprep.subr.mxu0 0.0
  %91 = vmatpush2.msra.mxu0 0.0
  %92 = vmatprep.subr.mxu0 0.0
  %93 = vmatpush2.msra.mxu0 0.0
  %94 = vmatprep.subr.mxu0 0.0
  %95 = vmatpush2.msra.mxu0 0.0
  %96 = vmatprep.subr.mxu0 0.0
  %97 = vmatpush2.msra.mxu0 0.0
  %98 = vmatprep.subr.mxu0 0.0
  %99 = vmatpush2.msra.mxu0 0.0
  %100 = vmatprep.subr.mxu0 0.0
  %101 = vmatpush2.msra.mxu0 0.0
  %102 = vmatprep.subr.mxu0 0.0
  %103 = vmatpush2.msra.mxu0 0.0
  %104 = vmatprep.subr.mxu0 0.0
  %105 = vmatpush2.msra.mxu0 0.0
  %106 = vmatprep.subr.mxu0 0.0
  %107 = vmatpush2.msra.mxu0 0.0
  %108 = vmatprep.subr.mxu0 0.0
  %109 = vmatpush2.msra.mxu0 0.0
  %110 = vmatprep.subr.mxu0 0.0
  %111 = vmatpush2.msra.mxu0 0.0
  %112 = vmatprep.mubr.f32.mxu0 0.0
  %113 = vmatmul.mubr.f32.gmra.mxu0 %v40
  %v114 = vpop.f32.mrf.mxu0
  %v115 = vadd.f32 %v36, %v114
  %v116 = vpop.f32.mrf.mxu0
  %117 = vmatprep.mubr.f32.mxu0 0.0
  %118 = vmatmul.mubr.f32.gmra.mxu0 %v43
  %v119 = vpop.f32.mrf.mxu0
  %v120 = vadd.f32 %v36, %v119
  %v121 = vpop.f32.mrf.mxu0
  %122 = vmatprep.mubr.f32.mxu0 0.0
  %123 = vmatmul.mubr.f32.gmra.mxu0 %v46
  %v124 = vpop.f32.mrf.mxu0
  %v125 = vadd.f32 %v36, %v124
  %v126 = vpop.f32.mrf.mxu0
  %127 = vdwg.mxu0
  %v128 = vmul.f32 %v115, 0.5
  %v129 = vmul.f32 %v120, 0.5
  %v130 = vmul.f32 %v125, 0.5
  %v131 = vmul.f32 %v115, 0.70710677
  %v132 = vmul.f32 %v120, 0.70710677
  %v133 = vmul.f32 %v125, 0.70710677
  %v134 = verf.f32.pop %v131
  %v135 = verf.f32.pop %v132
  %v136 = verf.f32.pop %v133
  %v137 = vadd.f32 %v134, 1.0
  %v138 = vadd.f32 %v135, 1.0
  %v139 = vadd.f32 %v136, 1.0
  %v140 = vmul.f32 %v128, %v137
  %v141 = vmul.f32 %v129, %v138
  %v142 = vmul.f32 %v130, %v139
  %v143 = vld [vmem:[%s3] sm:$0xff]
  %v144 = vld [vmem:[%s3 + $0x8] sm:$0xff]
  %v145 = vld [vmem:[%s3 + $0x10] sm:$0xff]
  %v146 = vld [vmem:[%s3 + $0x18] sm:$0xff]
  %v147 = vld [vmem:[%s4] sm:$0x1]
  %v149 = vlaneseq
  %v150 = vshrl.u32 %v149, 7
  %v151 = vsub.s32 0, %v150
  %v152 = vrot.slane %v147, %v151
  %vm154 = vcmask 261120
  %v156 = vsel %vm154, %v140, 0
  %v159 = vsel %vm154, %v141, 0
  %v162 = vsel %vm154, %v142, 0
  %164 = vmatprep.subr.mxu0 0.0
  %165 = vmatpush1.msra.mxu0 0.0
  %166 = vmatprep.subr.mxu0 0.0
  %167 = vmatpush1.msra.mxu0 0.0
  %168 = vmatprep.subr.mxu0 0.0
  %169 = vmatpush1.msra.mxu0 0.0
  %170 = vmatprep.subr.mxu0 0.0
  %171 = vmatpush1.msra.mxu0 0.0
  %172 = vmatprep.subr.mxu0 0.0
  %173 = vmatpush1.msra.mxu0 0.0
  %174 = vmatprep.subr.mxu0 0.0
  %175 = vmatpush1.msra.mxu0 0.0
  %176 = vmatprep.subr.mxu0 0.0
  %177 = vmatpush1.msra.mxu0 0.0
  %178 = vmatprep.subr.mxu0 0.0
  %179 = vmatpush1.msra.mxu0 0.0
  %180 = vmatprep.subr.mxu0 0.0
  %181 = vmatpush1.msra.mxu0 0.0
  %182 = vmatprep.subr.mxu0 0.0
  %183 = vmatpush1.msra.mxu0 0.0
  %184 = vmatprep.subr.mxu0 0.0
  %185 = vmatpush1.msra.mxu0 0.0
  %186 = vmatprep.subr.mxu0 0.0
  %187 = vmatpush1.msra.mxu0 0.0
  %188 = vmatprep.subr.mxu0 0.0
  %189 = vmatpush1.msra.mxu0 %v146
  %190 = vmatprep.subr.mxu0 0.0
  %191 = vmatpush1.msra.mxu0 %v145
  %192 = vmatprep.subr.mxu0 0.0
  %193 = vmatpush1.msra.mxu0 %v144
  %194 = vmatprep.subr.mxu0 0.0
  %195 = vmatpush1.msra.mxu0 %v143
  %196 = vmatprep.subr.mxu0 0.0
  %197 = vmatpush2.msra.mxu0 0.0
  %198 = vmatprep.subr.mxu0 0.0
  %199 = vmatpush2.msra.mxu0 0.0
  %200 = vmatprep.subr.mxu0 0.0
  %201 = vmatpush2.msra.mxu0 0.0
  %202 = vmatprep.subr.mxu0 0.0
  %203 = vmatpush2.msra.mxu0 0.0
  %204 = vmatprep.subr.mxu0 0.0
  %205 = vmatpush2.msra.mxu0 0.0
  %206 = vmatprep.subr.mxu0 0.0
  %207 = vmatpush2.msra.mxu0 0.0
  %208 = vmatprep.subr.mxu0 0.0
  %209 = vmatpush2.msra.mxu0 0.0
  %210 = vmatprep.subr.mxu0 0.0
  %211 = vmatpush2.msra.mxu0 0.0
  %212 = vmatprep.subr.mxu0 0.0
  %213 = vmatpush2.msra.mxu0 0.0
  %214 = vmatprep.subr.mxu0 0.0
  %215 = vmatpush2.msra.mxu0 0.0
  %216 = vmatprep.subr.mxu0 0.0
  %217 = vmatpush2.msra.mxu0 0.0
  %218 = vmatprep.subr.mxu0 0.0
  %219 = vmatpush2.msra.mxu0 0.0
  %220 = vmatprep.subr.mxu0 0.0
  %221 = vmatpush2.msra.mxu0 0.0
  %222 = vmatprep.subr.mxu0 0.0
  %223 = vmatpush2.msra.mxu0 0.0
  %224 = vmatprep.subr.mxu0 0.0
  %225 = vmatpush2.msra.mxu0 0.0
  %226 = vmatprep.subr.mxu0 0.0
  %227 = vmatpush2.msra.mxu0 0.0
  %228 = vmatprep.mubr.f32.mxu0 0.0
  %229 = vmatmul.mubr.f32.gmra.mxu0 %v156
  %v230 = vpop.f32.mrf.mxu0
  %v231 = vadd.f32 %v152, %v230
  %v232 = vpop.f32.mrf.mxu0
  %233 = vmatprep.mubr.f32.mxu0 0.0
  %234 = vmatmul.mubr.f32.gmra.mxu0 %v159
  %v235 = vpop.f32.mrf.mxu0
  %v236 = vadd.f32 %v152, %v235
  %v237 = vpop.f32.mrf.mxu0
  %238 = vmatprep.mubr.f32.mxu0 0.0
  %239 = vmatmul.mubr.f32.gmra.mxu0 %v162
  %v240 = vpop.f32.mrf.mxu0
  %v241 = vadd.f32 %v152, %v240
  %v242 = vpop.f32.mrf.mxu0
  %243 = vdwg.mxu0
  %244 = vst.msk [vmem:[%s5] sm:$0xff] %vm38, %v231
  %245 = vst.msk [vmem:[%s5 + $0x8] sm:$0xff] %vm38, %v236
  %vm246 = vcmask 517120
  %247 = vst.msk [vmem:[%s5 + $0x10] sm:$0x3] %vm246, %v241
  // Predicated region
  $region22: #{feedforward_pallas.1} parent=0 // pred_check
    _
  $region23: #{feedforward_pallas.1} parent=0 // pred_check_branch
    %249 = sbr.rel (0) target = $region25
  $region24: #{feedforward_pallas.1} parent=0 // pred_region
    _
  $region25: #{feedforward_pallas.1} parent=0 // pred_fallthru
    _
  // Predicated region
  $region26: #{feedforward_pallas.1} parent=0 // pred_check
    _
  $region27: #{feedforward_pallas.1} parent=0 // pred_check_branch
    %251 = sbr.rel (0) target = $region29
  $region28: #{feedforward_pallas.1} parent=0 // pred_region
    _
  $region29: #{feedforward_pallas.1} parent=0 // pred_fallthru
    _

</llo_original>
